<compile_context>
chip_gen: v5e
topology: v5e:2x2
jax: 0.10.0
libtpu: 0.0.40
codegen_flags: <defaults>
</compile_context>

<pallas_src>
import functools
import math

import jax
import jax.numpy as jnp
from jax import lax
from jax.experimental import pallas as pl
from jax.experimental.pallas import tpu as pltpu


def _round_up(x, m):
    return ((x + m - 1) // m) * m


def _sae_fused_kernel(x_ref, we_ref, be_ref, wd_ref, bd_ref, mask_ref, o_ref,
                      *scratch, H, W, B, cin, clat, cpad_in, cpad_lat):
    """Fused encode(conv3x3 + ReLU) -> decode(conv3x3) for B images.

    x_ref    : [B*cin, H*W]          input block, rows ordered (image, channel)
    we_ref   : [clat, 9*cpad_in]     packed encoder weights
    be_ref   : [clat, 1]             encoder bias
    wd_ref   : [cin, 9*cpad_lat]     packed decoder weights
    bd_ref   : [cin, 1]              decoder bias
    mask_ref : [9, B*H*W]            precomputed 0/1 boundary masks per tap
    o_ref    : [B*cin, H*W]          reconstruction block
    scratch  : xt_ref [cpad_in, B*HW]   channel-major staged input
               pe_ref [9*cpad_in, B*HW] encoder im2col patches
               pd_ref [9*cpad_lat, B*HW] decoder im2col patches
               (hpad_ref [cpad_lat, B*HW] only when clat < cpad_lat)
    """
    HW = H * W
    L = B * HW
    xt_ref, pe_ref, pd_ref = scratch[:3]
    hpad_ref = scratch[3] if len(scratch) > 3 else None

    # ---- stage input into channel-major layout [cpad_in, B*HW] -------------
    # rows: channel; columns: (image, spatial).  Pad channel rows are zeroed
    # every step (cheap) so this stays correct under megacore grid splitting.
    for i in range(B):
        xt_ref[0:cin, i * HW:(i + 1) * HW] = (
            x_ref[i * cin:(i + 1) * cin, :].astype(jnp.float32))
    if cpad_in > cin:
        xt_ref[cin:cpad_in, :] = jnp.zeros((cpad_in - cin, L), jnp.float32)

    def im2col(v, cpad, p_ref):
        # Build [9*cpad, B*HW] patch matrix for a 3x3 "same" conv: per tap one
        # XLU lane-roll of the whole slab + one VPU mask multiply + one dense
        # 8-sublane-aligned store.  Rolls that cross an image boundary land
        # only on positions the boundary mask zeroes out.
        for kh in range(3):
            for kw in range(3):
                t = kh * 3 + kw
                dh, dw = kh - 1, kw - 1
                off = dh * W + dw
                if off == 0:
                    piece = v
                else:
                    shifted = pltpu.roll(v, shift=(-off) % L, axis=1)
                    piece = shifted * mask_ref[t:t + 1, :]
                p_ref[t * cpad:(t + 1) * cpad, :] = piece

    # ---- encode: relu(conv3x3(x; w_enc) + b_enc); latent stays in VMEM -----
    xt = xt_ref[...]                                            # [cpad_in, L]
    im2col(xt, cpad_in, pe_ref)                                 # [9*cpad_in, L]
    h = jnp.dot(we_ref[...], pe_ref[...],
                preferred_element_type=jnp.float32)             # [clat, L]
    h = jnp.maximum(h + be_ref[...], 0.0)

    # ---- decode: conv3x3(h; w_dec) + b_dec ----------------------------------
    if hpad_ref is not None:
        hpad_ref[clat:cpad_lat, :] = jnp.zeros((cpad_lat - clat, L), jnp.float32)
        hpad_ref[0:clat, :] = h
        hsrc = hpad_ref[...]
    else:
        hsrc = h                                                # already 8-aligned
    im2col(hsrc, cpad_lat, pd_ref)                              # [9*cpad_lat, L]
    r = jnp.dot(wd_ref[...], pd_ref[...],
                preferred_element_type=jnp.float32)             # [cin, L]
    r = r + bd_ref[...]

    # ---- scatter back to (image, channel) row layout ------------------------
    for i in range(B):
        o_ref[i * cin:(i + 1) * cin, :] = (
            r[:, i * HW:(i + 1) * HW].astype(o_ref.dtype))


def _pack_conv_weights(w_hwio, cpad):
    """[3,3,cin,cout] HWIO -> [cout, 9*cpad]; column index = (kh*3+kw)*cpad + ci."""
    kh, kw, cin, cout = w_hwio.shape
    w9 = w_hwio.reshape(kh * kw, cin, cout)            # [9, cin, cout]
    w9 = jnp.transpose(w9, (2, 0, 1))                  # [cout, 9, cin]
    w9 = jnp.pad(w9, ((0, 0), (0, 0), (0, cpad - cin)))
    return w9.reshape(cout, kh * kw * cpad).astype(jnp.float32)


def _build_tap_masks(H, W, B):
    """Shape-static 0/1 boundary masks, [9, B*H*W]; XLA constant-folds these."""
    HW = H * W
    lane = jnp.arange(B * HW, dtype=jnp.int32)
    local = lane % HW
    row = local // W
    col = local % W
    masks = []
    for kh in range(3):
        for kw in range(3):
            dh, dw = kh - 1, kw - 1
            valid = ((row + dh >= 0) & (row + dh < H) &
                     (col + dw >= 0) & (col + dw < W))
            masks.append(valid.astype(jnp.float32))
    return jnp.stack(masks, axis=0)                    # [9, B*HW]


def init_params(key, in_channels, latent_channels):
    """Deterministic parameter init (PyTorch-Conv2d-style uniform fan-in)."""
    k1, k2, k3, k4 = jax.random.split(key, 4)
    s_enc = 1.0 / (9 * in_channels) ** 0.5
    s_dec = 1.0 / (9 * latent_channels) ** 0.5
    return {
        "w_enc": jax.random.uniform(k1, (3, 3, in_channels, latent_channels),
                                    jnp.float32, -s_enc, s_enc),
        "b_enc": jax.random.uniform(k2, (latent_channels,), jnp.float32,
                                    -s_enc, s_enc),
        "w_dec": jax.random.uniform(k3, (3, 3, latent_channels, in_channels),
                                    jnp.float32, -s_dec, s_dec),
        "b_dec": jax.random.uniform(k4, (in_channels,), jnp.float32,
                                    -s_dec, s_dec),
    }


def stacked_autoencoder_forward(image_nchw, params, *, b_tile_max=64):
    """StackedAutoEncoder.forward with prev_model=None.

    Args:
        image_nchw: [batch, channels, height, width]
    Returns:
        (prev_latent, recons), both NCHW with the same shape as the input.
    """
    N, C, H, W = image_nchw.shape
    HW = H * W
    # Lane-dense layout assumption (holds for the shipped 16x16 config).
    # TODO(synk): add a spatial-tile-with-halo path for H*W not a multiple of 128.
    assert HW % 128 == 0, "H*W must be a multiple of 128 for the lane-dense layout"

    clat = params["b_enc"].shape[0]
    cpad_in = _round_up(C, 8)
    cpad_lat = _round_up(clat, 8)

    # Batch tile: B_TILE*C must be a multiple of 8 (dense sublane blocks);
    # b_tile_max=64 keeps the two f32 patch scratches + I/O well inside the
    # v5e 16 MiB default scoped VMEM (and trivially inside v6e/v7x budgets).
    b_unit = 8 // math.gcd(C, 8)
    bt = min(b_tile_max, _round_up(N, b_unit))
    B_TILE = max(b_unit, (bt // b_unit) * b_unit)
    N_pad = _round_up(N, B_TILE)

    # Tiny host-side prep (once per call; shape-static pieces constant-fold).
    we = _pack_conv_weights(params["w_enc"], cpad_in)     # [clat, 9*cpad_in]
    wd = _pack_conv_weights(params["w_dec"], cpad_lat)    # [C,    9*cpad_lat]
    be = params["b_enc"].reshape(clat, 1).astype(jnp.float32)
    bd = params["b_dec"].reshape(C, 1).astype(jnp.float32)
    masks = _build_tap_masks(H, W, B_TILE)                # [9, B_TILE*HW]

    # Free reshape (contiguous trailing dims): NCHW -> [N*C, H*W].
    x2 = image_nchw.reshape(N * C, HW)
    if N_pad != N:
        x2 = jnp.pad(x2, ((0, (N_pad - N) * C), (0, 0)))

    kernel = functools.partial(_sae_fused_kernel, H=H, W=W, B=B_TILE, cin=C,
                               clat=clat, cpad_in=cpad_in, cpad_lat=cpad_lat)

    scratch_shapes = [
        pltpu.VMEM((cpad_in, B_TILE * HW), jnp.float32),       # staged input
        pltpu.VMEM((9 * cpad_in, B_TILE * HW), jnp.float32),   # encoder patches
        pltpu.VMEM((9 * cpad_lat, B_TILE * HW), jnp.float32),  # decoder patches
    ]
    if cpad_lat > clat:
        scratch_shapes.append(pltpu.VMEM((cpad_lat, B_TILE * HW), jnp.float32))

    recons2 = pl.pallas_call(
        kernel,
        out_shape=jax.ShapeDtypeStruct((N_pad * C, HW), image_nchw.dtype),
        grid_spec=pltpu.PrefetchScalarGridSpec(
            num_scalar_prefetch=0,
            grid=(N_pad // B_TILE,),
            in_specs=[
                pl.BlockSpec((B_TILE * C, HW), lambda n: (n, 0)),
                pl.BlockSpec((clat, 9 * cpad_in), lambda n: (0, 0)),
                pl.BlockSpec((clat, 1), lambda n: (0, 0)),
                pl.BlockSpec((C, 9 * cpad_lat), lambda n: (0, 0)),
                pl.BlockSpec((C, 1), lambda n: (0, 0)),
                pl.BlockSpec((9, B_TILE * HW), lambda n: (0, 0)),
            ],
            out_specs=pl.BlockSpec((B_TILE * C, HW), lambda n: (n, 0)),
            scratch_shapes=scratch_shapes,
        ),
        compiler_params=pltpu.CompilerParams(
            dimension_semantics=("parallel",)),
    )(x2, we, be, wd, bd, masks)

    recons = recons2[:N * C].reshape(N, C, H, W)
    prev_latent = image_nchw   # IdentityModel.full_encode(image); detach() is a no-op
    return prev_latent, recons


# Plain-JAX reference conv (NCHW) for correctness checking.
def _conv3x3_ref_nchw(x, w_hwio, b, relu):
    out = lax.conv_general_dilated(
        x, w_hwio, window_strides=(1, 1), padding="SAME",
        dimension_numbers=("NCHW", "HWIO", "NCHW"))
    out = out + b.reshape(1, -1, 1, 1)
    if relu:
        out = jnp.maximum(out, 0.0)
    return out


if __name__ == "__main__":
    key = jax.random.PRNGKey(0)
    kx, kp = jax.random.split(key)

    N, C, H, W = 2, 4, 16, 16
    LATENT_C = 8

    image = jax.random.normal(kx, (N, C, H, W), jnp.float32)
    params = init_params(kp, C, LATENT_C)

    fwd = jax.jit(stacked_autoencoder_forward)
    prev_latent, recons = fwd(image, params)
    jax.block_until_ready((prev_latent, recons))

    # Reference check against XLA conv.
    h_ref = _conv3x3_ref_nchw(image, params["w_enc"], params["b_enc"], relu=True)
    recons_ref = _conv3x3_ref_nchw(h_ref, params["w_dec"], params["b_dec"], relu=False)

    assert prev_latent.shape == image.shape
    assert recons.shape == image.shape
    assert jnp.allclose(prev_latent, image)
    assert jnp.allclose(recons, recons_ref, rtol=1e-3, atol=1e-3), (
        float(jnp.max(jnp.abs(recons - recons_ref))))

    # TODO(synk): loss()/scalars()/images() (MSELoss, torch.std, image_utils
    # logging helpers) are training/logging utilities, not part of forward.
    print("KERNEL_OK")
</pallas_src>

<mosaic_0001>
module attributes {stable_mosaic.version = 11 : i64} {
  func.func @_sae_fused_kernel(%arg0: i32, %arg1: memref<8x256xf32, #tpu.memory_space<vmem>>, %arg2: memref<8x72xf32, #tpu.memory_space<vmem>>, %arg3: memref<8x1xf32, #tpu.memory_space<vmem>>, %arg4: memref<4x72xf32, #tpu.memory_space<vmem>>, %arg5: memref<4x1xf32, #tpu.memory_space<vmem>>, %arg6: memref<9x512xf32, #tpu.memory_space<vmem>>, %arg7: memref<8x256xf32, #tpu.memory_space<vmem>>, %arg8: memref<8x512xf32, #tpu.memory_space<vmem>>, %arg9: memref<72x512xf32, #tpu.memory_space<vmem>>, %arg10: memref<72x512xf32, #tpu.memory_space<vmem>>) attributes {dimension_semantics = [#tpu.dimension_semantics<parallel>], iteration_bounds = array<i64: 1>, scalar_prefetch = 0 : i64, scratch_operands = 3 : i64, tpu.core_type = #tpu.core_type<tc>, window_params = [{transform_indices = @transform_0, window_bounds = array<i64: 8, 256>}, {pipeline_mode = #tpu.pipeline_mode<synchronous>, transform_indices = @transform_1, window_bounds = array<i64: 8, 72>}, {pipeline_mode = #tpu.pipeline_mode<synchronous>, transform_indices = @transform_2, window_bounds = array<i64: 8, 1>}, {pipeline_mode = #tpu.pipeline_mode<synchronous>, transform_indices = @transform_3, window_bounds = array<i64: 4, 72>}, {pipeline_mode = #tpu.pipeline_mode<synchronous>, transform_indices = @transform_4, window_bounds = array<i64: 4, 1>}, {pipeline_mode = #tpu.pipeline_mode<synchronous>, transform_indices = @transform_5, window_bounds = array<i64: 9, 512>}, {transform_indices = @transform_6, window_bounds = array<i64: 8, 256>}]} {
    %c0 = arith.constant 0 : index
    %c0_0 = arith.constant 0 : index
    %0 = vector.load %arg1[%c0, %c0_0] : memref<8x256xf32, #tpu.memory_space<vmem>>, vector<4x256xf32>
    %c0_1 = arith.constant 0 : index
    %c0_2 = arith.constant 0 : index
    %1 = vector.load %arg8[%c0_1, %c0_2] : memref<8x512xf32, #tpu.memory_space<vmem>>, vector<4x256xf32>
    tpu.vector_store %arg8[%c0_1, %c0_2], %0 {strides = array<i32>} : memref<8x512xf32, #tpu.memory_space<vmem>>, vector<4x256xf32>,
    %c4 = arith.constant 4 : index
    %c0_3 = arith.constant 0 : index
    %2 = vector.load %arg1[%c4, %c0_3] : memref<8x256xf32, #tpu.memory_space<vmem>>, vector<4x256xf32>
    %c0_4 = arith.constant 0 : index
    %c256 = arith.constant 256 : index
    %3 = vector.load %arg8[%c0_4, %c256] : memref<8x512xf32, #tpu.memory_space<vmem>>, vector<4x256xf32>
    tpu.vector_store %arg8[%c0_4, %c256], %2 {strides = array<i32>} : memref<8x512xf32, #tpu.memory_space<vmem>>, vector<4x256xf32>,
    %cst = arith.constant 0.000000e+00 : f32
    %4 = vector.broadcast %cst : f32 to vector<4x512xf32>
    %c4_5 = arith.constant 4 : index
    %c0_6 = arith.constant 0 : index
    %5 = vector.load %arg8[%c4_5, %c0_6] : memref<8x512xf32, #tpu.memory_space<vmem>>, vector<4x512xf32>
    tpu.vector_store %arg8[%c4_5, %c0_6], %4 {strides = array<i32>} : memref<8x512xf32, #tpu.memory_space<vmem>>, vector<4x512xf32>,
    %c0_7 = arith.constant 0 : index
    %c0_8 = arith.constant 0 : index
    %6 = vector.load %arg8[%c0_7, %c0_8] : memref<8x512xf32, #tpu.memory_space<vmem>>, vector<8x512xf32>
    %c17_i32 = arith.constant 17 : i32
    %7 = tpu.dynamic_rotate %6 by %c17_i32 dim 1 : vector<8x512xf32>, i32 -> vector<8x512xf32>
    %c0_9 = arith.constant 0 : index
    %c0_10 = arith.constant 0 : index
    %8 = vector.load %arg6[%c0_9, %c0_10] : memref<9x512xf32, #tpu.memory_space<vmem>>, vector<1x512xf32>
    %9 = vector.broadcast %8 : vector<1x512xf32> to vector<8x512xf32>
    %10 = arith.mulf %7, %9 : vector<8x512xf32>
    %c0_11 = arith.constant 0 : index
    %c0_12 = arith.constant 0 : index
    %11 = vector.load %arg9[%c0_11, %c0_12] : memref<72x512xf32, #tpu.memory_space<vmem>>, vector<8x512xf32>
    tpu.vector_store %arg9[%c0_11, %c0_12], %10 {strides = array<i32>} : memref<72x512xf32, #tpu.memory_space<vmem>>, vector<8x512xf32>,
    %c16_i32 = arith.constant 16 : i32
    %12 = tpu.dynamic_rotate %6 by %c16_i32 dim 1 : vector<8x512xf32>, i32 -> vector<8x512xf32>
    %c1 = arith.constant 1 : index
    %c0_13 = arith.constant 0 : index
    %13 = vector.load %arg6[%c1, %c0_13] : memref<9x512xf32, #tpu.memory_space<vmem>>, vector<1x512xf32>
    %14 = vector.broadcast %13 : vector<1x512xf32> to vector<8x512xf32>
    %15 = arith.mulf %12, %14 : vector<8x512xf32>
    %c8 = arith.constant 8 : index
    %c0_14 = arith.constant 0 : index
    %16 = vector.load %arg9[%c8, %c0_14] : memref<72x512xf32, #tpu.memory_space<vmem>>, vector<8x512xf32>
    tpu.vector_store %arg9[%c8, %c0_14], %15 {strides = array<i32>} : memref<72x512xf32, #tpu.memory_space<vmem>>, vector<8x512xf32>,
    %c15_i32 = arith.constant 15 : i32
    %17 = tpu.dynamic_rotate %6 by %c15_i32 dim 1 : vector<8x512xf32>, i32 -> vector<8x512xf32>
    %c2 = arith.constant 2 : index
    %c0_15 = arith.constant 0 : index
    %18 = vector.load %arg6[%c2, %c0_15] : memref<9x512xf32, #tpu.memory_space<vmem>>, vector<1x512xf32>
    %19 = vector.broadcast %18 : vector<1x512xf32> to vector<8x512xf32>
    %20 = arith.mulf %17, %19 : vector<8x512xf32>
    %c16 = arith.constant 16 : index
    %c0_16 = arith.constant 0 : index
    %21 = vector.load %arg9[%c16, %c0_16] : memref<72x512xf32, #tpu.memory_space<vmem>>, vector<8x512xf32>
    tpu.vector_store %arg9[%c16, %c0_16], %20 {strides = array<i32>} : memref<72x512xf32, #tpu.memory_space<vmem>>, vector<8x512xf32>,
    %c1_i32 = arith.constant 1 : i32
    %22 = tpu.dynamic_rotate %6 by %c1_i32 dim 1 : vector<8x512xf32>, i32 -> vector<8x512xf32>
    %c3 = arith.constant 3 : index
    %c0_17 = arith.constant 0 : index
    %23 = vector.load %arg6[%c3, %c0_17] : memref<9x512xf32, #tpu.memory_space<vmem>>, vector<1x512xf32>
    %24 = vector.broadcast %23 : vector<1x512xf32> to vector<8x512xf32>
    %25 = arith.mulf %22, %24 : vector<8x512xf32>
    %c24 = arith.constant 24 : index
    %c0_18 = arith.constant 0 : index
    %26 = vector.load %arg9[%c24, %c0_18] : memref<72x512xf32, #tpu.memory_space<vmem>>, vector<8x512xf32>
    tpu.vector_store %arg9[%c24, %c0_18], %25 {strides = array<i32>} : memref<72x512xf32, #tpu.memory_space<vmem>>, vector<8x512xf32>,
    %c32 = arith.constant 32 : index
    %c0_19 = arith.constant 0 : index
    %27 = vector.load %arg9[%c32, %c0_19] : memref<72x512xf32, #tpu.memory_space<vmem>>, vector<8x512xf32>
    tpu.vector_store %arg9[%c32, %c0_19], %6 {strides = array<i32>} : memref<72x512xf32, #tpu.memory_space<vmem>>, vector<8x512xf32>,
    %c511_i32 = arith.constant 511 : i32
    %28 = tpu.dynamic_rotate %6 by %c511_i32 dim 1 : vector<8x512xf32>, i32 -> vector<8x512xf32>
    %c5 = arith.constant 5 : index
    %c0_20 = arith.constant 0 : index
    %29 = vector.load %arg6[%c5, %c0_20] : memref<9x512xf32, #tpu.memory_space<vmem>>, vector<1x512xf32>
    %30 = vector.broadcast %29 : vector<1x512xf32> to vector<8x512xf32>
    %31 = arith.mulf %28, %30 : vector<8x512xf32>
    %c40 = arith.constant 40 : index
    %c0_21 = arith.constant 0 : index
    %32 = vector.load %arg9[%c40, %c0_21] : memref<72x512xf32, #tpu.memory_space<vmem>>, vector<8x512xf32>
    tpu.vector_store %arg9[%c40, %c0_21], %31 {strides = array<i32>} : memref<72x512xf32, #tpu.memory_space<vmem>>, vector<8x512xf32>,
    %c497_i32 = arith.constant 497 : i32
    %33 = tpu.dynamic_rotate %6 by %c497_i32 dim 1 : vector<8x512xf32>, i32 -> vector<8x512xf32>
    %c6 = arith.constant 6 : index
    %c0_22 = arith.constant 0 : index
    %34 = vector.load %arg6[%c6, %c0_22] : memref<9x512xf32, #tpu.memory_space<vmem>>, vector<1x512xf32>
    %35 = vector.broadcast %34 : vector<1x512xf32> to vector<8x512xf32>
    %36 = arith.mulf %33, %35 : vector<8x512xf32>
    %c48 = arith.constant 48 : index
    %c0_23 = arith.constant 0 : index
    %37 = vector.load %arg9[%c48, %c0_23] : memref<72x512xf32, #tpu.memory_space<vmem>>, vector<8x512xf32>
    tpu.vector_store %arg9[%c48, %c0_23], %36 {strides = array<i32>} : memref<72x512xf32, #tpu.memory_space<vmem>>, vector<8x512xf32>,
    %c496_i32 = arith.constant 496 : i32
    %38 = tpu.dynamic_rotate %6 by %c496_i32 dim 1 : vector<8x512xf32>, i32 -> vector<8x512xf32>
    %c7 = arith.constant 7 : index
    %c0_24 = arith.constant 0 : index
    %39 = vector.load %arg6[%c7, %c0_24] : memref<9x512xf32, #tpu.memory_space<vmem>>, vector<1x512xf32>
    %40 = vector.broadcast %39 : vector<1x512xf32> to vector<8x512xf32>
    %41 = arith.mulf %38, %40 : vector<8x512xf32>
    %c56 = arith.constant 56 : index
    %c0_25 = arith.constant 0 : index
    %42 = vector.load %arg9[%c56, %c0_25] : memref<72x512xf32, #tpu.memory_space<vmem>>, vector<8x512xf32>
    tpu.vector_store %arg9[%c56, %c0_25], %41 {strides = array<i32>} : memref<72x512xf32, #tpu.memory_space<vmem>>, vector<8x512xf32>,
    %c495_i32 = arith.constant 495 : i32
    %43 = tpu.dynamic_rotate %6 by %c495_i32 dim 1 : vector<8x512xf32>, i32 -> vector<8x512xf32>
    %c8_26 = arith.constant 8 : index
    %c0_27 = arith.constant 0 : index
    %44 = vector.load %arg6[%c8_26, %c0_27] : memref<9x512xf32, #tpu.memory_space<vmem>>, vector<1x512xf32>
    %45 = vector.broadcast %44 : vector<1x512xf32> to vector<8x512xf32>
    %46 = arith.mulf %43, %45 : vector<8x512xf32>
    %c64 = arith.constant 64 : index
    %c0_28 = arith.constant 0 : index
    %47 = vector.load %arg9[%c64, %c0_28] : memref<72x512xf32, #tpu.memory_space<vmem>>, vector<8x512xf32>
    tpu.vector_store %arg9[%c64, %c0_28], %46 {strides = array<i32>} : memref<72x512xf32, #tpu.memory_space<vmem>>, vector<8x512xf32>,
    %c0_29 = arith.constant 0 : index
    %c0_30 = arith.constant 0 : index
    %48 = vector.load %arg2[%c0_29, %c0_30] : memref<8x72xf32, #tpu.memory_space<vmem>>, vector<8x72xf32>
    %c0_31 = arith.constant 0 : index
    %c0_32 = arith.constant 0 : index
    %49 = vector.load %arg9[%c0_31, %c0_32] : memref<72x512xf32, #tpu.memory_space<vmem>>, vector<72x512xf32>
    %cst_33 = arith.constant dense<0.000000e+00> : vector<8x512xf32>
    %50 = tpu.matmul %48, %49, %cst_33 {dimension_numbers = #tpu.dot_dimension_numbers<[1], [0], [0], [1], [0, 0, 1, 1], [], []>} : vector<8x72xf32>, vector<72x512xf32>, vector<8x512xf32> -> vector<8x512xf32>
    %c0_34 = arith.constant 0 : index
    %c0_35 = arith.constant 0 : index
    %51 = vector.load %arg3[%c0_34, %c0_35] : memref<8x1xf32, #tpu.memory_space<vmem>>, vector<8x1xf32>
    %52 = vector.broadcast %51 : vector<8x1xf32> to vector<8x512xf32>
    %53 = arith.addf %50, %52 : vector<8x512xf32>
    %cst_36 = arith.constant 0.000000e+00 : f32
    %54 = vector.broadcast %cst_36 : f32 to vector<8x512xf32>
    %55 = arith.maximumf %53, %54 : vector<8x512xf32>
    %c17_i32_37 = arith.constant 17 : i32
    %56 = tpu.dynamic_rotate %55 by %c17_i32_37 dim 1 : vector<8x512xf32>, i32 -> vector<8x512xf32>
    %c0_38 = arith.constant 0 : index
    %c0_39 = arith.constant 0 : index
    %57 = vector.load %arg6[%c0_38, %c0_39] : memref<9x512xf32, #tpu.memory_space<vmem>>, vector<1x512xf32>
    %58 = vector.broadcast %57 : vector<1x512xf32> to vector<8x512xf32>
    %59 = arith.mulf %56, %58 : vector<8x512xf32>
    %c0_40 = arith.constant 0 : index
    %c0_41 = arith.constant 0 : index
    %60 = vector.load %arg10[%c0_40, %c0_41] : memref<72x512xf32, #tpu.memory_space<vmem>>, vector<8x512xf32>
    tpu.vector_store %arg10[%c0_40, %c0_41], %59 {strides = array<i32>} : memref<72x512xf32, #tpu.memory_space<vmem>>, vector<8x512xf32>,
    %c16_i32_42 = arith.constant 16 : i32
    %61 = tpu.dynamic_rotate %55 by %c16_i32_42 dim 1 : vector<8x512xf32>, i32 -> vector<8x512xf32>
    %c1_43 = arith.constant 1 : index
    %c0_44 = arith.constant 0 : index
    %62 = vector.load %arg6[%c1_43, %c0_44] : memref<9x512xf32, #tpu.memory_space<vmem>>, vector<1x512xf32>
    %63 = vector.broadcast %62 : vector<1x512xf32> to vector<8x512xf32>
    %64 = arith.mulf %61, %63 : vector<8x512xf32>
    %c8_45 = arith.constant 8 : index
    %c0_46 = arith.constant 0 : index
    %65 = vector.load %arg10[%c8_45, %c0_46] : memref<72x512xf32, #tpu.memory_space<vmem>>, vector<8x512xf32>
    tpu.vector_store %arg10[%c8_45, %c0_46], %64 {strides = array<i32>} : memref<72x512xf32, #tpu.memory_space<vmem>>, vector<8x512xf32>,
    %c15_i32_47 = arith.constant 15 : i32
    %66 = tpu.dynamic_rotate %55 by %c15_i32_47 dim 1 : vector<8x512xf32>, i32 -> vector<8x512xf32>
    %c2_48 = arith.constant 2 : index
    %c0_49 = arith.constant 0 : index
    %67 = vector.load %arg6[%c2_48, %c0_49] : memref<9x512xf32, #tpu.memory_space<vmem>>, vector<1x512xf32>
    %68 = vector.broadcast %67 : vector<1x512xf32> to vector<8x512xf32>
    %69 = arith.mulf %66, %68 : vector<8x512xf32>
    %c16_50 = arith.constant 16 : index
    %c0_51 = arith.constant 0 : index
    %70 = vector.load %arg10[%c16_50, %c0_51] : memref<72x512xf32, #tpu.memory_space<vmem>>, vector<8x512xf32>
    tpu.vector_store %arg10[%c16_50, %c0_51], %69 {strides = array<i32>} : memref<72x512xf32, #tpu.memory_space<vmem>>, vector<8x512xf32>,
    %c1_i32_52 = arith.constant 1 : i32
    %71 = tpu.dynamic_rotate %55 by %c1_i32_52 dim 1 : vector<8x512xf32>, i32 -> vector<8x512xf32>
    %c3_53 = arith.constant 3 : index
    %c0_54 = arith.constant 0 : index
    %72 = vector.load %arg6[%c3_53, %c0_54] : memref<9x512xf32, #tpu.memory_space<vmem>>, vector<1x512xf32>
    %73 = vector.broadcast %72 : vector<1x512xf32> to vector<8x512xf32>
    %74 = arith.mulf %71, %73 : vector<8x512xf32>
    %c24_55 = arith.constant 24 : index
    %c0_56 = arith.constant 0 : index
    %75 = vector.load %arg10[%c24_55, %c0_56] : memref<72x512xf32, #tpu.memory_space<vmem>>, vector<8x512xf32>
    tpu.vector_store %arg10[%c24_55, %c0_56], %74 {strides = array<i32>} : memref<72x512xf32, #tpu.memory_space<vmem>>, vector<8x512xf32>,
    %c32_57 = arith.constant 32 : index
    %c0_58 = arith.constant 0 : index
    %76 = vector.load %arg10[%c32_57, %c0_58] : memref<72x512xf32, #tpu.memory_space<vmem>>, vector<8x512xf32>
    tpu.vector_store %arg10[%c32_57, %c0_58], %55 {strides = array<i32>} : memref<72x512xf32, #tpu.memory_space<vmem>>, vector<8x512xf32>,
    %c511_i32_59 = arith.constant 511 : i32
    %77 = tpu.dynamic_rotate %55 by %c511_i32_59 dim 1 : vector<8x512xf32>, i32 -> vector<8x512xf32>
    %c5_60 = arith.constant 5 : index
    %c0_61 = arith.constant 0 : index
    %78 = vector.load %arg6[%c5_60, %c0_61] : memref<9x512xf32, #tpu.memory_space<vmem>>, vector<1x512xf32>
    %79 = vector.broadcast %78 : vector<1x512xf32> to vector<8x512xf32>
    %80 = arith.mulf %77, %79 : vector<8x512xf32>
    %c40_62 = arith.constant 40 : index
    %c0_63 = arith.constant 0 : index
    %81 = vector.load %arg10[%c40_62, %c0_63] : memref<72x512xf32, #tpu.memory_space<vmem>>, vector<8x512xf32>
    tpu.vector_store %arg10[%c40_62, %c0_63], %80 {strides = array<i32>} : memref<72x512xf32, #tpu.memory_space<vmem>>, vector<8x512xf32>,
    %c497_i32_64 = arith.constant 497 : i32
    %82 = tpu.dynamic_rotate %55 by %c497_i32_64 dim 1 : vector<8x512xf32>, i32 -> vector<8x512xf32>
    %c6_65 = arith.constant 6 : index
    %c0_66 = arith.constant 0 : index
    %83 = vector.load %arg6[%c6_65, %c0_66] : memref<9x512xf32, #tpu.memory_space<vmem>>, vector<1x512xf32>
    %84 = vector.broadcast %83 : vector<1x512xf32> to vector<8x512xf32>
    %85 = arith.mulf %82, %84 : vector<8x512xf32>
    %c48_67 = arith.constant 48 : index
    %c0_68 = arith.constant 0 : index
    %86 = vector.load %arg10[%c48_67, %c0_68] : memref<72x512xf32, #tpu.memory_space<vmem>>, vector<8x512xf32>
    tpu.vector_store %arg10[%c48_67, %c0_68], %85 {strides = array<i32>} : memref<72x512xf32, #tpu.memory_space<vmem>>, vector<8x512xf32>,
    %c496_i32_69 = arith.constant 496 : i32
    %87 = tpu.dynamic_rotate %55 by %c496_i32_69 dim 1 : vector<8x512xf32>, i32 -> vector<8x512xf32>
    %c7_70 = arith.constant 7 : index
    %c0_71 = arith.constant 0 : index
    %88 = vector.load %arg6[%c7_70, %c0_71] : memref<9x512xf32, #tpu.memory_space<vmem>>, vector<1x512xf32>
    %89 = vector.broadcast %88 : vector<1x512xf32> to vector<8x512xf32>
    %90 = arith.mulf %87, %89 : vector<8x512xf32>
    %c56_72 = arith.constant 56 : index
    %c0_73 = arith.constant 0 : index
    %91 = vector.load %arg10[%c56_72, %c0_73] : memref<72x512xf32, #tpu.memory_space<vmem>>, vector<8x512xf32>
    tpu.vector_store %arg10[%c56_72, %c0_73], %90 {strides = array<i32>} : memref<72x512xf32, #tpu.memory_space<vmem>>, vector<8x512xf32>,
    %c495_i32_74 = arith.constant 495 : i32
    %92 = tpu.dynamic_rotate %55 by %c495_i32_74 dim 1 : vector<8x512xf32>, i32 -> vector<8x512xf32>
    %c8_75 = arith.constant 8 : index
    %c0_76 = arith.constant 0 : index
    %93 = vector.load %arg6[%c8_75, %c0_76] : memref<9x512xf32, #tpu.memory_space<vmem>>, vector<1x512xf32>
    %94 = vector.broadcast %93 : vector<1x512xf32> to vector<8x512xf32>
    %95 = arith.mulf %92, %94 : vector<8x512xf32>
    %c64_77 = arith.constant 64 : index
    %c0_78 = arith.constant 0 : index
    %96 = vector.load %arg10[%c64_77, %c0_78] : memref<72x512xf32, #tpu.memory_space<vmem>>, vector<8x512xf32>
    tpu.vector_store %arg10[%c64_77, %c0_78], %95 {strides = array<i32>} : memref<72x512xf32, #tpu.memory_space<vmem>>, vector<8x512xf32>,
    %c0_79 = arith.constant 0 : index
    %c0_80 = arith.constant 0 : index
    %97 = vector.load %arg4[%c0_79, %c0_80] : memref<4x72xf32, #tpu.memory_space<vmem>>, vector<4x72xf32>
    %c0_81 = arith.constant 0 : index
    %c0_82 = arith.constant 0 : index
    %98 = vector.load %arg10[%c0_81, %c0_82] : memref<72x512xf32, #tpu.memory_space<vmem>>, vector<72x512xf32>
    %cst_83 = arith.constant dense<0.000000e+00> : vector<4x512xf32>
    %99 = tpu.matmul %97, %98, %cst_83 {dimension_numbers = #tpu.dot_dimension_numbers<[1], [0], [0], [1], [0, 0, 1, 1], [], []>} : vector<4x72xf32>, vector<72x512xf32>, vector<4x512xf32> -> vector<4x512xf32>
    %c0_84 = arith.constant 0 : index
    %c0_85 = arith.constant 0 : index
    %100 = vector.load %arg5[%c0_84, %c0_85] : memref<4x1xf32, #tpu.memory_space<vmem>>, vector<4x1xf32>
    %101 = vector.broadcast %100 : vector<4x1xf32> to vector<4x512xf32>
    %102 = arith.addf %99, %101 : vector<4x512xf32>
    %103 = vector.extract_strided_slice %102 {offsets = [0, 0], sizes = [4, 256], strides = [1, 1]} : vector<4x512xf32> to vector<4x256xf32>
    %c0_86 = arith.constant 0 : index
    %c0_87 = arith.constant 0 : index
    %104 = vector.load %arg7[%c0_86, %c0_87] : memref<8x256xf32, #tpu.memory_space<vmem>>, vector<4x256xf32>
    tpu.vector_store %arg7[%c0_86, %c0_87], %103 {strides = array<i32>} : memref<8x256xf32, #tpu.memory_space<vmem>>, vector<4x256xf32>,
    %105 = vector.extract_strided_slice %102 {offsets = [0, 256], sizes = [4, 256], strides = [1, 1]} : vector<4x512xf32> to vector<4x256xf32>
    %c4_88 = arith.constant 4 : index
    %c0_89 = arith.constant 0 : index
    %106 = vector.load %arg7[%c4_88, %c0_89] : memref<8x256xf32, #tpu.memory_space<vmem>>, vector<4x256xf32>
    tpu.vector_store %arg7[%c4_88, %c0_89], %105 {strides = array<i32>} : memref<8x256xf32, #tpu.memory_space<vmem>>, vector<4x256xf32>,
    return
  }
  func.func @transform_0(%arg0: i32) -> (i32, i32) {
    %c0_i32 = arith.constant 0 : i32
    %c0_i32_0 = arith.constant 0 : i32
    return %arg0, %c0_i32 : i32, i32
  }
  func.func @transform_1(%arg0: i32) -> (i32, i32) {
    %c0_i32 = arith.constant 0 : i32
    %c0_i32_0 = arith.constant 0 : i32
    %c0_i32_1 = arith.constant 0 : i32
    return %c0_i32, %c0_i32_0 : i32, i32
  }
  func.func @transform_2(%arg0: i32) -> (i32, i32) {
    %c0_i32 = arith.constant 0 : i32
    %c0_i32_0 = arith.constant 0 : i32
    %c0_i32_1 = arith.constant 0 : i32
    return %c0_i32, %c0_i32_0 : i32, i32
  }
  func.func @transform_3(%arg0: i32) -> (i32, i32) {
    %c0_i32 = arith.constant 0 : i32
    %c0_i32_0 = arith.constant 0 : i32
    %c0_i32_1 = arith.constant 0 : i32
    return %c0_i32, %c0_i32_0 : i32, i32
  }
  func.func @transform_4(%arg0: i32) -> (i32, i32) {
    %c0_i32 = arith.constant 0 : i32
    %c0_i32_0 = arith.constant 0 : i32
    %c0_i32_1 = arith.constant 0 : i32
    return %c0_i32, %c0_i32_0 : i32, i32
  }
  func.func @transform_5(%arg0: i32) -> (i32, i32) {
    %c0_i32 = arith.constant 0 : i32
    %c0_i32_0 = arith.constant 0 : i32
    %c0_i32_1 = arith.constant 0 : i32
    return %c0_i32, %c0_i32_0 : i32, i32
  }
  func.func @transform_6(%arg0: i32) -> (i32, i32) {
    %c0_i32 = arith.constant 0 : i32
    %c0_i32_0 = arith.constant 0 : i32
    return %arg0, %c0_i32 : i32, i32
  }
}

</mosaic_0001>

<llo_original>
// kernel: stacked_autoencoder_forward.1
$region0: #{stacked_autoencoder_forward.1}
  #allocation0 [shape = 'u32[]', space=smem, size = 0x4, offset = 0x4, fixed_abs, tag = 'smem constant byte address 0x4 - core index']
  #allocation1 [shape = 'u32[72,128]{1,0:T(1,128)}', space=vmem, size = 0x9000, scoped, tag = 'internal scratch']
  #allocation2 [shape = 'f32[8,512]{1,0:T(8,128)}', space=vmem, size = 0x4000, scoped, tag = 'scratch operand']
  #allocation3 [shape = 'f32[72,512]{1,0:T(8,128)}', space=vmem, size = 0x24000, scoped, tag = 'scratch operand']
  #allocation4 [shape = 'f32[72,512]{1,0:T(8,128)}', space=vmem, size = 0x24000, scoped, tag = 'scratch operand']
  %s0 = inlined_call_operand.vmem [shape: f32[8,256], index: 0, kind: input, shape index: {}]
  %s1 = inlined_call_operand.vmem [shape: f32[8,72], index: 1, kind: input, shape index: {}]
  %s2 = inlined_call_operand.vmem [shape: f32[8,1], index: 2, kind: input, shape index: {}]
  %s3 = inlined_call_operand.vmem [shape: f32[4,72], index: 3, kind: input, shape index: {}]
  %s4 = inlined_call_operand.vmem [shape: f32[4,1], index: 4, kind: input, shape index: {}]
  %s5 = inlined_call_operand.vmem [shape: f32[9,512], index: 5, kind: input, shape index: {}]
  %s6 = inlined_call_operand.vmem [shape: f32[8,256], index: 6, kind: output, shape index: {}]
  %s7 = sld [smem:[#allocation0]]
  $region34: #{stacked_autoencoder_forward.1} parent=0
    _
  %s9 = ssub.s32 1, %s7
  %s10 = scalar_select 0, %s9, %s7
  // Predicated region
  $region2: #{stacked_autoencoder_forward.1} parent=0 // pred_check
    _
  $region3: #{stacked_autoencoder_forward.1} parent=0 // pred_check_branch
    %12 = sbr.rel (0) target = $region5
  $region4: #{stacked_autoencoder_forward.1} parent=0 // pred_region
    _
  $region5: #{stacked_autoencoder_forward.1} parent=0 // pred_fallthru
    _
  // Predicated region
  $region6: #{stacked_autoencoder_forward.1} parent=0 // pred_check
    _
  $region7: #{stacked_autoencoder_forward.1} parent=0 // pred_check_branch
    %14 = sbr.rel (0) target = $region9
  $region8: #{stacked_autoencoder_forward.1} parent=0 // pred_region
    _
  $region9: #{stacked_autoencoder_forward.1} parent=0 // pred_fallthru
    _
  // Predicated region
  $region10: #{stacked_autoencoder_forward.1} parent=0 // pred_check
    _
  $region11: #{stacked_autoencoder_forward.1} parent=0 // pred_check_branch
    %16 = sbr.rel (0) target = $region13
  $region12: #{stacked_autoencoder_forward.1} parent=0 // pred_region
    _
  $region13: #{stacked_autoencoder_forward.1} parent=0 // pred_fallthru
    _
  // Predicated region
  $region14: #{stacked_autoencoder_forward.1} parent=0 // pred_check
    _
  $region15: #{stacked_autoencoder_forward.1} parent=0 // pred_check_branch
    %18 = sbr.rel (0) target = $region17
  $region16: #{stacked_autoencoder_forward.1} parent=0 // pred_region
    _
  $region17: #{stacked_autoencoder_forward.1} parent=0 // pred_fallthru
    _
  // Predicated region
  $region18: #{stacked_autoencoder_forward.1} parent=0 // pred_check
    _
  $region19: #{stacked_autoencoder_forward.1} parent=0 // pred_check_branch
    %20 = sbr.rel (0) target = $region21
  $region20: #{stacked_autoencoder_forward.1} parent=0 // pred_region
    _
  $region21: #{stacked_autoencoder_forward.1} parent=0 // pred_fallthru
    _
  // Predicated region
  $region22: #{stacked_autoencoder_forward.1} parent=0 // pred_check
    _
  $region23: #{stacked_autoencoder_forward.1} parent=0 // pred_check_branch
    %22 = sbr.rel (0) target = $region25
  $region24: #{stacked_autoencoder_forward.1} parent=0 // pred_region
    _
  $region25: #{stacked_autoencoder_forward.1} parent=0 // pred_fallthru
    _
  %v23 = vld [vmem:[%s0] sm:$0xf]
  %v24 = vld [vmem:[%s0 + $0x8] sm:$0xf]
  %25 = vst [vmem:[#allocation2] sm:$0xf] %v23
  %26 = vst [vmem:[#allocation2 + $0x8] sm:$0xf] %v24
  %v27 = vld [vmem:[%s0] sm:$0xf0]
  %v28 = vld [vmem:[%s0 + $0x8] sm:$0xf0]
  %v31 = vrot.slane %v27, 4
  %v32 = vrot.slane %v28, 4
  %35 = vst [vmem:[#allocation2 + $0x10] sm:$0xf] %v31
  %36 = vst [vmem:[#allocation2 + $0x18] sm:$0xf] %v32
  %37 = vst [vmem:[#allocation2] sm:$0xf0] 0.0
  %38 = vst [vmem:[#allocation2 + $0x8] sm:$0xf0] 0.0
  %39 = vst [vmem:[#allocation2 + $0x10] sm:$0xf0] 0.0
  %40 = vst [vmem:[#allocation2 + $0x18] sm:$0xf0] 0.0
  %v41 = vld [vmem:[#allocation2] sm:$0xff]
  %v42 = vld [vmem:[#allocation2 + $0x8] sm:$0xff]
  %v43 = vld [vmem:[#allocation2 + $0x10] sm:$0xff]
  %v44 = vld [vmem:[#allocation2 + $0x18] sm:$0xff]
  %45 = vrot.lane.b32.xlu0 %v41, 17
  %v46 = vpop.permute.xlu0 %45
  %47 = vrot.lane.b32.xlu0 %v42, 17
  %v48 = vpop.permute.xlu0 %47
  %49 = vrot.lane.b32.xlu0 %v43, 17
  %v50 = vpop.permute.xlu0 %49
  %51 = vrot.lane.b32.xlu0 %v44, 17
  %v52 = vpop.permute.xlu0 %51
  %v53 = vlaneseq
  %v54 = vand.u32 %v53, 127
  %vm55 = vcmp.lt.s32.totalorder %v54, 17
  %v56 = vsel %vm55, %v50, %v52
  %v57 = vsel %vm55, %v48, %v50
  %v58 = vsel %vm55, %v46, %v48
  %v59 = vsel %vm55, %v52, %v46
  %v60 = vld [vmem:[%s5] ss:$8 sm:$0xf]
  %v62 = vperm.slane %v60, 0
  %v63 = vperm.slane %v60, 1
  %v64 = vperm.slane %v60, 2
  %v65 = vperm.slane %v60, 3
  %v70 = vmul.f32 %v59, %v62
  %v71 = vmul.f32 %v58, %v63
  %v72 = vmul.f32 %v57, %v64
  %v73 = vmul.f32 %v56, %v65
  %74 = vst [vmem:[#allocation3] sm:$0xff] %v70
  %75 = vst [vmem:[#allocation3 + $0x8] sm:$0xff] %v71
  %76 = vst [vmem:[#allocation3 + $0x10] sm:$0xff] %v72
  %77 = vst [vmem:[#allocation3 + $0x18] sm:$0xff] %v73
  %78 = vrot.lane.b32.xlu0 %v41, 16
  %v79 = vpop.permute.xlu0 %78
  %80 = vrot.lane.b32.xlu0 %v42, 16
  %v81 = vpop.permute.xlu0 %80
  %82 = vrot.lane.b32.xlu0 %v43, 16
  %v83 = vpop.permute.xlu0 %82
  %84 = vrot.lane.b32.xlu0 %v44, 16
  %v85 = vpop.permute.xlu0 %84
  %vm86 = vcmp.lt.s32.totalorder %v54, 16
  %v87 = vsel %vm86, %v83, %v85
  %v88 = vsel %vm86, %v81, %v83
  %v89 = vsel %vm86, %v79, %v81
  %v90 = vsel %vm86, %v85, %v79
  %s91 = scalar_lea.vmem %s5, 1
  %v92 = vld [vmem:[%s91] ss:$8 sm:$0xf]
  %v94 = vperm.slane %v92, 0
  %v95 = vperm.slane %v92, 1
  %v96 = vperm.slane %v92, 2
  %v97 = vperm.slane %v92, 3
  %v102 = vmul.f32 %v90, %v94
  %v103 = vmul.f32 %v89, %v95
  %v104 = vmul.f32 %v88, %v96
  %v105 = vmul.f32 %v87, %v97
  %106 = vst [vmem:[#allocation3 + $0x20] sm:$0xff] %v102
  %107 = vst [vmem:[#allocation3 + $0x28] sm:$0xff] %v103
  %108 = vst [vmem:[#allocation3 + $0x30] sm:$0xff] %v104
  %109 = vst [vmem:[#allocation3 + $0x38] sm:$0xff] %v105
  %110 = vrot.lane.b32.xlu0 %v41, 15
  %v111 = vpop.permute.xlu0 %110
  %112 = vrot.lane.b32.xlu0 %v42, 15
  %v113 = vpop.permute.xlu0 %112
  %114 = vrot.lane.b32.xlu0 %v43, 15
  %v115 = vpop.permute.xlu0 %114
  %116 = vrot.lane.b32.xlu0 %v44, 15
  %v117 = vpop.permute.xlu0 %116
  %vm118 = vcmp.lt.s32.totalorder %v54, 15
  %v119 = vsel %vm118, %v115, %v117
  %v120 = vsel %vm118, %v113, %v115
  %v121 = vsel %vm118, %v111, %v113
  %v122 = vsel %vm118, %v117, %v111
  %s123 = scalar_lea.vmem %s5, 2
  %v124 = vld [vmem:[%s123] ss:$8 sm:$0xf]
  %v126 = vperm.slane %v124, 0
  %v127 = vperm.slane %v124, 1
  %v128 = vperm.slane %v124, 2
  %v129 = vperm.slane %v124, 3
  %v134 = vmul.f32 %v122, %v126
  %v135 = vmul.f32 %v121, %v127
  %v136 = vmul.f32 %v120, %v128
  %v137 = vmul.f32 %v119, %v129
  %138 = vst [vmem:[#allocation3 + $0x40] sm:$0xff] %v134
  %139 = vst [vmem:[#allocation3 + $0x48] sm:$0xff] %v135
  %140 = vst [vmem:[#allocation3 + $0x50] sm:$0xff] %v136
  %141 = vst [vmem:[#allocation3 + $0x58] sm:$0xff] %v137
  %142 = vrot.lane.b32.xlu0 %v41, 1
  %v143 = vpop.permute.xlu0 %142
  %144 = vrot.lane.b32.xlu0 %v42, 1
  %v145 = vpop.permute.xlu0 %144
  %146 = vrot.lane.b32.xlu0 %v43, 1
  %v147 = vpop.permute.xlu0 %146
  %148 = vrot.lane.b32.xlu0 %v44, 1
  %v149 = vpop.permute.xlu0 %148
  %vm150 = vcmp.lt.s32.totalorder %v54, 1
  %v151 = vsel %vm150, %v147, %v149
  %v152 = vsel %vm150, %v145, %v147
  %v153 = vsel %vm150, %v143, %v145
  %v154 = vsel %vm150, %v149, %v143
  %s155 = scalar_lea.vmem %s5, 3
  %v156 = vld [vmem:[%s155] ss:$8 sm:$0xf]
  %v158 = vperm.slane %v156, 0
  %v159 = vperm.slane %v156, 1
  %v160 = vperm.slane %v156, 2
  %v161 = vperm.slane %v156, 3
  %v166 = vmul.f32 %v154, %v158
  %v167 = vmul.f32 %v153, %v159
  %v168 = vmul.f32 %v152, %v160
  %v169 = vmul.f32 %v151, %v161
  %170 = vst [vmem:[#allocation3 + $0x60] sm:$0xff] %v166
  %171 = vst [vmem:[#allocation3 + $0x68] sm:$0xff] %v167
  %172 = vst [vmem:[#allocation3 + $0x70] sm:$0xff] %v168
  %173 = vst [vmem:[#allocation3 + $0x78] sm:$0xff] %v169
  %174 = vst [vmem:[#allocation3 + $0x80] sm:$0xff] %v41
  %175 = vst [vmem:[#allocation3 + $0x88] sm:$0xff] %v42
  %176 = vst [vmem:[#allocation3 + $0x90] sm:$0xff] %v43
  %177 = vst [vmem:[#allocation3 + $0x98] sm:$0xff] %v44
  %178 = vrot.lane.b32.xlu0 %v41, 127
  %v179 = vpop.permute.xlu0 %178
  %180 = vrot.lane.b32.xlu0 %v42, 127
  %v181 = vpop.permute.xlu0 %180
  %182 = vrot.lane.b32.xlu0 %v43, 127
  %v183 = vpop.permute.xlu0 %182
  %184 = vrot.lane.b32.xlu0 %v44, 127
  %v185 = vpop.permute.xlu0 %184
  %vm186 = vcmp.lt.s32.totalorder %v54, 127
  %v187 = vsel %vm186, %v183, %v185
  %v188 = vsel %vm186, %v181, %v183
  %v189 = vsel %vm186, %v179, %v181
  %v190 = vsel %vm186, %v185, %v179
  %s191 = scalar_lea.vmem %s5, 5
  %v192 = vld [vmem:[%s191] ss:$8 sm:$0xf]
  %v194 = vperm.slane %v192, 0
  %v195 = vperm.slane %v192, 1
  %v196 = vperm.slane %v192, 2
  %v197 = vperm.slane %v192, 3
  %v202 = vmul.f32 %v189, %v194
  %v203 = vmul.f32 %v188, %v195
  %v204 = vmul.f32 %v187, %v196
  %v205 = vmul.f32 %v190, %v197
  %206 = vst [vmem:[#allocation3 + $0xa0] sm:$0xff] %v202
  %207 = vst [vmem:[#allocation3 + $0xa8] sm:$0xff] %v203
  %208 = vst [vmem:[#allocation3 + $0xb0] sm:$0xff] %v204
  %209 = vst [vmem:[#allocation3 + $0xb8] sm:$0xff] %v205
  %210 = vrot.lane.b32.xlu0 %v41, 113
  %v211 = vpop.permute.xlu0 %210
  %212 = vrot.lane.b32.xlu0 %v42, 113
  %v213 = vpop.permute.xlu0 %212
  %214 = vrot.lane.b32.xlu0 %v43, 113
  %v215 = vpop.permute.xlu0 %214
  %216 = vrot.lane.b32.xlu0 %v44, 113
  %v217 = vpop.permute.xlu0 %216
  %vm218 = vcmp.lt.s32.totalorder %v54, 113
  %v219 = vsel %vm218, %v215, %v217
  %v220 = vsel %vm218, %v213, %v215
  %v221 = vsel %vm218, %v211, %v213
  %v222 = vsel %vm218, %v217, %v211
  %s223 = scalar_lea.vmem %s5, 6
  %v224 = vld [vmem:[%s223] ss:$8 sm:$0xf]
  %v226 = vperm.slane %v224, 0
  %v227 = vperm.slane %v224, 1
  %v228 = vperm.slane %v224, 2
  %v229 = vperm.slane %v224, 3
  %v234 = vmul.f32 %v221, %v226
  %v235 = vmul.f32 %v220, %v227
  %v236 = vmul.f32 %v219, %v228
  %v237 = vmul.f32 %v222, %v229
  %238 = vst [vmem:[#allocation3 + $0xc0] sm:$0xff] %v234
  %239 = vst [vmem:[#allocation3 + $0xc8] sm:$0xff] %v235
  %240 = vst [vmem:[#allocation3 + $0xd0] sm:$0xff] %v236
  %241 = vst [vmem:[#allocation3 + $0xd8] sm:$0xff] %v237
  %242 = vrot.lane.b32.xlu0 %v41, 112
  %v243 = vpop.permute.xlu0 %242
  %244 = vrot.lane.b32.xlu0 %v42, 112
  %v245 = vpop.permute.xlu0 %244
  %246 = vrot.lane.b32.xlu0 %v43, 112
  %v247 = vpop.permute.xlu0 %246
  %248 = vrot.lane.b32.xlu0 %v44, 112
  %v249 = vpop.permute.xlu0 %248
  %vm250 = vcmp.lt.s32.totalorder %v54, 112
  %v251 = vsel %vm250, %v247, %v249
  %v252 = vsel %vm250, %v245, %v247
  %v253 = vsel %vm250, %v243, %v245
  %v254 = vsel %vm250, %v249, %v243
  %s255 = scalar_lea.vmem %s5, 7
  %v256 = vld [vmem:[%s255] ss:$8 sm:$0xf]
  %v258 = vperm.slane %v256, 0
  %v259 = vperm.slane %v256, 1
  %v260 = vperm.slane %v256, 2
  %v261 = vperm.slane %v256, 3
  %v266 = vmul.f32 %v253, %v258
  %v267 = vmul.f32 %v252, %v259
  %v268 = vmul.f32 %v251, %v260
  %v269 = vmul.f32 %v254, %v261
  %270 = vst [vmem:[#allocation3 + $0xe0] sm:$0xff] %v266
  %271 = vst [vmem:[#allocation3 + $0xe8] sm:$0xff] %v267
  %272 = vst [vmem:[#allocation3 + $0xf0] sm:$0xff] %v268
  %273 = vst [vmem:[#allocation3 + $0xf8] sm:$0xff] %v269
  %274 = vrot.lane.b32.xlu0 %v41, 111
  %v275 = vpop.permute.xlu0 %274
  %276 = vrot.lane.b32.xlu0 %v42, 111
  %v277 = vpop.permute.xlu0 %276
  %278 = vrot.lane.b32.xlu0 %v43, 111
  %v279 = vpop.permute.xlu0 %278
  %280 = vrot.lane.b32.xlu0 %v44, 111
  %v281 = vpop.permute.xlu0 %280
  %vm282 = vcmp.lt.s32.totalorder %v54, 111
  %v283 = vsel %vm282, %v279, %v281
  %v284 = vsel %vm282, %v277, %v279
  %v285 = vsel %vm282, %v275, %v277
  %v286 = vsel %vm282, %v281, %v275
  %s287 = scalar_lea.vmem %s5, 32
  %v288 = vld [vmem:[%s287] ss:$8 sm:$0xf]
  %v290 = vperm.slane %v288, 0
  %v291 = vperm.slane %v288, 1
  %v292 = vperm.slane %v288, 2
  %v293 = vperm.slane %v288, 3
  %v298 = vmul.f32 %v285, %v290
  %v299 = vmul.f32 %v284, %v291
  %v300 = vmul.f32 %v283, %v292
  %v301 = vmul.f32 %v286, %v293
  %302 = vst [vmem:[#allocation3 + $0x100] sm:$0xff] %v298
  %303 = vst [vmem:[#allocation3 + $0x108] sm:$0xff] %v299
  %304 = vst [vmem:[#allocation3 + $0x110] sm:$0xff] %v300
  %305 = vst [vmem:[#allocation3 + $0x118] sm:$0xff] %v301
  %v306 = vld [vmem:[%s1] sm:$0xff]
  %v307 = vld [vmem:[#allocation3] sm:$0xff]
  %v308 = vld [vmem:[#allocation3 + $0x8] sm:$0xff]
  %v309 = vld [vmem:[#allocation3 + $0x10] sm:$0xff]
  %v310 = vld [vmem:[#allocation3 + $0x18] sm:$0xff]
  %v311 = vld [vmem:[#allocation3 + $0x20] sm:$0xff]
  %v312 = vld [vmem:[#allocation3 + $0x28] sm:$0xff]
  %v313 = vld [vmem:[#allocation3 + $0x30] sm:$0xff]
  %v314 = vld [vmem:[#allocation3 + $0x38] sm:$0xff]
  %v315 = vld [vmem:[#allocation3 + $0x40] sm:$0xff]
  %v316 = vld [vmem:[#allocation3 + $0x48] sm:$0xff]
  %v317 = vld [vmem:[#allocation3 + $0x50] sm:$0xff]
  %v318 = vld [vmem:[#allocation3 + $0x58] sm:$0xff]
  %v319 = vld [vmem:[#allocation3 + $0x60] sm:$0xff]
  %v320 = vld [vmem:[#allocation3 + $0x68] sm:$0xff]
  %v321 = vld [vmem:[#allocation3 + $0x70] sm:$0xff]
  %v322 = vld [vmem:[#allocation3 + $0x78] sm:$0xff]
  %v323 = vld [vmem:[#allocation3 + $0x80] sm:$0xff]
  %v324 = vld [vmem:[#allocation3 + $0x88] sm:$0xff]
  %v325 = vld [vmem:[#allocation3 + $0x90] sm:$0xff]
  %v326 = vld [vmem:[#allocation3 + $0x98] sm:$0xff]
  %v327 = vld [vmem:[#allocation3 + $0xa0] sm:$0xff]
  %v328 = vld [vmem:[#allocation3 + $0xa8] sm:$0xff]
  %v329 = vld [vmem:[#allocation3 + $0xb0] sm:$0xff]
  %v330 = vld [vmem:[#allocation3 + $0xb8] sm:$0xff]
  %v331 = vld [vmem:[#allocation3 + $0xc0] sm:$0xff]
  %v332 = vld [vmem:[#allocation3 + $0xc8] sm:$0xff]
  %v333 = vld [vmem:[#allocation3 + $0xd0] sm:$0xff]
  %v334 = vld [vmem:[#allocation3 + $0xd8] sm:$0xff]
  %v335 = vld [vmem:[#allocation3 + $0xe0] sm:$0xff]
  %v336 = vld [vmem:[#allocation3 + $0xe8] sm:$0xff]
  %v337 = vld [vmem:[#allocation3 + $0xf0] sm:$0xff]
  %v338 = vld [vmem:[#allocation3 + $0xf8] sm:$0xff]
  %v339 = vld [vmem:[#allocation3 + $0x100] sm:$0xff]
  %v340 = vld [vmem:[#allocation3 + $0x108] sm:$0xff]
  %v341 = vld [vmem:[#allocation3 + $0x110] sm:$0xff]
  %v342 = vld [vmem:[#allocation3 + $0x118] sm:$0xff]
  %v343 = vld [vmem:[%s2] sm:$0xff]
  %345 = vset.pattern.permute.xlu0 0
  %346 = vperm.xlu0 %345, %v343
  %v347 = vpop.permute.xlu0 %346
  %vm349 = vcmask 588800
  %v351 = vsel %vm349, %v306, 0
  %353 = vmatpush.msra.mxu0 0.0
  %354 = vmatpush.msra.mxu0 0.0
  %355 = vmatpush.msra.mxu0 0.0
  %356 = vmatpush.msra.mxu0 0.0
  %357 = vmatpush.msra.mxu0 0.0
  %358 = vmatpush.msra.mxu0 0.0
  %359 = vmatpush.msra.mxu0 0.0
  %360 = vmatpush.msra.mxu0 %v339
  %361 = vmatpush.msra.mxu0 %v335
  %362 = vmatpush.msra.mxu0 %v331
  %363 = vmatpush.msra.mxu0 %v327
  %364 = vmatpush.msra.mxu0 %v323
  %365 = vmatpush.msra.mxu0 %v319
  %366 = vmatpush.msra.mxu0 %v315
  %367 = vmatpush.msra.mxu0 %v311
  %368 = vmatpush.msra.mxu0 %v307
  %369 = vmatmul.f32.gmra.mxu0 %v351
  %v370 = vpop.f32.mrf.mxu0
  %v371 = vadd.f32 %v347, %v370
  %372 = vdwg.mxu0
  %373 = vmatpush.msra.mxu0 0.0
  %374 = vmatpush.msra.mxu0 0.0
  %375 = vmatpush.msra.mxu0 0.0
  %376 = vmatpush.msra.mxu0 0.0
  %377 = vmatpush.msra.mxu0 0.0
  %378 = vmatpush.msra.mxu0 0.0
  %379 = vmatpush.msra.mxu0 0.0
  %380 = vmatpush.msra.mxu0 %v340
  %381 = vmatpush.msra.mxu0 %v336
  %382 = vmatpush.msra.mxu0 %v332
  %383 = vmatpush.msra.mxu0 %v328
  %384 = vmatpush.msra.mxu0 %v324
  %385 = vmatpush.msra.mxu0 %v320
  %386 = vmatpush.msra.mxu0 %v316
  %387 = vmatpush.msra.mxu0 %v312
  %388 = vmatpush.msra.mxu0 %v308
  %389 = vmatmul.f32.gmra.mxu0 %v351
  %v390 = vpop.f32.mrf.mxu0
  %v391 = vadd.f32 %v347, %v390
  %392 = vdwg.mxu0
  %393 = vmatpush.msra.mxu0 0.0
  %394 = vmatpush.msra.mxu0 0.0
  %395 = vmatpush.msra.mxu0 0.0
  %396 = vmatpush.msra.mxu0 0.0
  %397 = vmatpush.msra.mxu0 0.0
  %398 = vmatpush.msra.mxu0 0.0
  %399 = vmatpush.msra.mxu0 0.0
  %400 = vmatpush.msra.mxu0 %v341
  %401 = vmatpush.msra.mxu0 %v337
  %402 = vmatpush.msra.mxu0 %v333
  %403 = vmatpush.msra.mxu0 %v329
  %404 = vmatpush.msra.mxu0 %v325
  %405 = vmatpush.msra.mxu0 %v321
  %406 = vmatpush.msra.mxu0 %v317
  %407 = vmatpush.msra.mxu0 %v313
  %408 = vmatpush.msra.mxu0 %v309
  %409 = vmatmul.f32.gmra.mxu0 %v351
  %v410 = vpop.f32.mrf.mxu0
  %v411 = vadd.f32 %v347, %v410
  %412 = vdwg.mxu0
  %413 = vmatpush.msra.mxu0 0.0
  %414 = vmatpush.msra.mxu0 0.0
  %415 = vmatpush.msra.mxu0 0.0
  %416 = vmatpush.msra.mxu0 0.0
  %417 = vmatpush.msra.mxu0 0.0
  %418 = vmatpush.msra.mxu0 0.0
  %419 = vmatpush.msra.mxu0 0.0
  %420 = vmatpush.msra.mxu0 %v342
  %421 = vmatpush.msra.mxu0 %v338
  %422 = vmatpush.msra.mxu0 %v334
  %423 = vmatpush.msra.mxu0 %v330
  %424 = vmatpush.msra.mxu0 %v326
  %425 = vmatpush.msra.mxu0 %v322
  %426 = vmatpush.msra.mxu0 %v318
  %427 = vmatpush.msra.mxu0 %v314
  %428 = vmatpush.msra.mxu0 %v310
  %429 = vmatmul.f32.gmra.mxu0 %v351
  %v430 = vpop.f32.mrf.mxu0
  %v431 = vadd.f32 %v347, %v430
  %432 = vdwg.mxu0
  %v433 = vmax.f32 %v371, 0.0
  %v434 = vmax.f32 %v391, 0.0
  %v435 = vmax.f32 %v411, 0.0
  %v436 = vmax.f32 %v431, 0.0
  %437 = vrot.lane.b32.xlu0 %v433, 17
  %v438 = vpop.permute.xlu0 %437
  %439 = vrot.lane.b32.xlu0 %v434, 17
  %v440 = vpop.permute.xlu0 %439
  %441 = vrot.lane.b32.xlu0 %v435, 17
  %v442 = vpop.permute.xlu0 %441
  %443 = vrot.lane.b32.xlu0 %v436, 17
  %v444 = vpop.permute.xlu0 %443
  %v445 = vsel %vm55, %v442, %v444
  %v446 = vsel %vm55, %v440, %v442
  %v447 = vsel %vm55, %v438, %v440
  %v448 = vsel %vm55, %v444, %v438
  %v449 = vld [vmem:[%s5] ss:$8 sm:$0xf]
  %v451 = vperm.slane %v449, 0
  %v452 = vperm.slane %v449, 1
  %v453 = vperm.slane %v449, 2
  %v454 = vperm.slane %v449, 3
  %v459 = vmul.f32 %v448, %v451
  %v460 = vmul.f32 %v447, %v452
  %v461 = vmul.f32 %v446, %v453
  %v462 = vmul.f32 %v445, %v454
  %463 = vst [vmem:[#allocation4] sm:$0xff] %v459
  %464 = vst [vmem:[#allocation4 + $0x8] sm:$0xff] %v460
  %465 = vst [vmem:[#allocation4 + $0x10] sm:$0xff] %v461
  %466 = vst [vmem:[#allocation4 + $0x18] sm:$0xff] %v462
  %467 = vrot.lane.b32.xlu0 %v433, 16
  %v468 = vpop.permute.xlu0 %467
  %469 = vrot.lane.b32.xlu0 %v434, 16
  %v470 = vpop.permute.xlu0 %469
  %471 = vrot.lane.b32.xlu0 %v435, 16
  %v472 = vpop.permute.xlu0 %471
  %473 = vrot.lane.b32.xlu0 %v436, 16
  %v474 = vpop.permute.xlu0 %473
  %v475 = vsel %vm86, %v472, %v474
  %v476 = vsel %vm86, %v470, %v472
  %v477 = vsel %vm86, %v468, %v470
  %v478 = vsel %vm86, %v474, %v468
  %v479 = vld [vmem:[%s91] ss:$8 sm:$0xf]
  %v481 = vperm.slane %v479, 0
  %v482 = vperm.slane %v479, 1
  %v483 = vperm.slane %v479, 2
  %v484 = vperm.slane %v479, 3
  %v489 = vmul.f32 %v478, %v481
  %v490 = vmul.f32 %v477, %v482
  %v491 = vmul.f32 %v476, %v483
  %v492 = vmul.f32 %v475, %v484
  %493 = vst [vmem:[#allocation4 + $0x20] sm:$0xff] %v489
  %494 = vst [vmem:[#allocation4 + $0x28] sm:$0xff] %v490
  %495 = vst [vmem:[#allocation4 + $0x30] sm:$0xff] %v491
  %496 = vst [vmem:[#allocation4 + $0x38] sm:$0xff] %v492
  %497 = vrot.lane.b32.xlu0 %v433, 15
  %v498 = vpop.permute.xlu0 %497
  %499 = vrot.lane.b32.xlu0 %v434, 15
  %v500 = vpop.permute.xlu0 %499
  %501 = vrot.lane.b32.xlu0 %v435, 15
  %v502 = vpop.permute.xlu0 %501
  %503 = vrot.lane.b32.xlu0 %v436, 15
  %v504 = vpop.permute.xlu0 %503
  %v505 = vsel %vm118, %v502, %v504
  %v506 = vsel %vm118, %v500, %v502
  %v507 = vsel %vm118, %v498, %v500
  %v508 = vsel %vm118, %v504, %v498
  %v509 = vld [vmem:[%s123] ss:$8 sm:$0xf]
  %v511 = vperm.slane %v509, 0
  %v512 = vperm.slane %v509, 1
  %v513 = vperm.slane %v509, 2
  %v514 = vperm.slane %v509, 3
  %v519 = vmul.f32 %v508, %v511
  %v520 = vmul.f32 %v507, %v512
  %v521 = vmul.f32 %v506, %v513
  %v522 = vmul.f32 %v505, %v514
  %523 = vst [vmem:[#allocation4 + $0x40] sm:$0xff] %v519
  %524 = vst [vmem:[#allocation4 + $0x48] sm:$0xff] %v520
  %525 = vst [vmem:[#allocation4 + $0x50] sm:$0xff] %v521
  %526 = vst [vmem:[#allocation4 + $0x58] sm:$0xff] %v522
  %527 = vrot.lane.b32.xlu0 %v433, 1
  %v528 = vpop.permute.xlu0 %527
  %529 = vrot.lane.b32.xlu0 %v434, 1
  %v530 = vpop.permute.xlu0 %529
  %531 = vrot.lane.b32.xlu0 %v435, 1
  %v532 = vpop.permute.xlu0 %531
  %533 = vrot.lane.b32.xlu0 %v436, 1
  %v534 = vpop.permute.xlu0 %533
  %v535 = vsel %vm150, %v532, %v534
  %v536 = vsel %vm150, %v530, %v532
  %v537 = vsel %vm150, %v528, %v530
  %v538 = vsel %vm150, %v534, %v528
  %v539 = vld [vmem:[%s155] ss:$8 sm:$0xf]
  %v541 = vperm.slane %v539, 0
  %v542 = vperm.slane %v539, 1
  %v543 = vperm.slane %v539, 2
  %v544 = vperm.slane %v539, 3
  %v549 = vmul.f32 %v538, %v541
  %v550 = vmul.f32 %v537, %v542
  %v551 = vmul.f32 %v536, %v543
  %v552 = vmul.f32 %v535, %v544
  %553 = vst [vmem:[#allocation4 + $0x60] sm:$0xff] %v549
  %554 = vst [vmem:[#allocation4 + $0x68] sm:$0xff] %v550
  %555 = vst [vmem:[#allocation4 + $0x70] sm:$0xff] %v551
  %556 = vst [vmem:[#allocation4 + $0x78] sm:$0xff] %v552
  %557 = vst [vmem:[#allocation4 + $0x80] sm:$0xff] %v433
  %558 = vst [vmem:[#allocation4 + $0x88] sm:$0xff] %v434
  %559 = vst [vmem:[#allocation4 + $0x90] sm:$0xff] %v435
  %560 = vst [vmem:[#allocation4 + $0x98] sm:$0xff] %v436
  %561 = vrot.lane.b32.xlu0 %v433, 127
  %v562 = vpop.permute.xlu0 %561
  %563 = vrot.lane.b32.xlu0 %v434, 127
  %v564 = vpop.permute.xlu0 %563
  %565 = vrot.lane.b32.xlu0 %v435, 127
  %v566 = vpop.permute.xlu0 %565
  %567 = vrot.lane.b32.xlu0 %v436, 127
  %v568 = vpop.permute.xlu0 %567
  %v569 = vsel %vm186, %v566, %v568
  %v570 = vsel %vm186, %v564, %v566
  %v571 = vsel %vm186, %v562, %v564
  %v572 = vsel %vm186, %v568, %v562
  %v573 = vld [vmem:[%s191] ss:$8 sm:$0xf]
  %v575 = vperm.slane %v573, 0
  %v576 = vperm.slane %v573, 1
  %v577 = vperm.slane %v573, 2
  %v578 = vperm.slane %v573, 3
  %v583 = vmul.f32 %v571, %v575
  %v584 = vmul.f32 %v570, %v576
  %v585 = vmul.f32 %v569, %v577
  %v586 = vmul.f32 %v572, %v578
  %587 = vst [vmem:[#allocation4 + $0xa0] sm:$0xff] %v583
  %588 = vst [vmem:[#allocation4 + $0xa8] sm:$0xff] %v584
  %589 = vst [vmem:[#allocation4 + $0xb0] sm:$0xff] %v585
  %590 = vst [vmem:[#allocation4 + $0xb8] sm:$0xff] %v586
  %591 = vrot.lane.b32.xlu0 %v433, 113
  %v592 = vpop.permute.xlu0 %591
  %593 = vrot.lane.b32.xlu0 %v434, 113
  %v594 = vpop.permute.xlu0 %593
  %595 = vrot.lane.b32.xlu0 %v435, 113
  %v596 = vpop.permute.xlu0 %595
  %597 = vrot.lane.b32.xlu0 %v436, 113
  %v598 = vpop.permute.xlu0 %597
  %v599 = vsel %vm218, %v596, %v598
  %v600 = vsel %vm218, %v594, %v596
  %v601 = vsel %vm218, %v592, %v594
  %v602 = vsel %vm218, %v598, %v592
  %v603 = vld [vmem:[%s223] ss:$8 sm:$0xf]
  %v605 = vperm.slane %v603, 0
  %v606 = vperm.slane %v603, 1
  %v607 = vperm.slane %v603, 2
  %v608 = vperm.slane %v603, 3
  %v613 = vmul.f32 %v601, %v605
  %v614 = vmul.f32 %v600, %v606
  %v615 = vmul.f32 %v599, %v607
  %v616 = vmul.f32 %v602, %v608
  %617 = vst [vmem:[#allocation4 + $0xc0] sm:$0xff] %v613
  %618 = vst [vmem:[#allocation4 + $0xc8] sm:$0xff] %v614
  %619 = vst [vmem:[#allocation4 + $0xd0] sm:$0xff] %v615
  %620 = vst [vmem:[#allocation4 + $0xd8] sm:$0xff] %v616
  %621 = vrot.lane.b32.xlu0 %v433, 112
  %v622 = vpop.permute.xlu0 %621
  %623 = vrot.lane.b32.xlu0 %v434, 112
  %v624 = vpop.permute.xlu0 %623
  %625 = vrot.lane.b32.xlu0 %v435, 112
  %v626 = vpop.permute.xlu0 %625
  %627 = vrot.lane.b32.xlu0 %v436, 112
  %v628 = vpop.permute.xlu0 %627
  %v629 = vsel %vm250, %v626, %v628
  %v630 = vsel %vm250, %v624, %v626
  %v631 = vsel %vm250, %v622, %v624
  %v632 = vsel %vm250, %v628, %v622
  %v633 = vld [vmem:[%s255] ss:$8 sm:$0xf]
  %v635 = vperm.slane %v633, 0
  %v636 = vperm.slane %v633, 1
  %v637 = vperm.slane %v633, 2
  %v638 = vperm.slane %v633, 3
  %v643 = vmul.f32 %v631, %v635
  %v644 = vmul.f32 %v630, %v636
  %v645 = vmul.f32 %v629, %v637
  %v646 = vmul.f32 %v632, %v638
  %647 = vst [vmem:[#allocation4 + $0xe0] sm:$0xff] %v643
  %648 = vst [vmem:[#allocation4 + $0xe8] sm:$0xff] %v644
  %649 = vst [vmem:[#allocation4 + $0xf0] sm:$0xff] %v645
  %650 = vst [vmem:[#allocation4 + $0xf8] sm:$0xff] %v646
  %651 = vrot.lane.b32.xlu0 %v433, 111
  %v652 = vpop.permute.xlu0 %651
  %653 = vrot.lane.b32.xlu0 %v434, 111
  %v654 = vpop.permute.xlu0 %653
  %655 = vrot.lane.b32.xlu0 %v435, 111
  %v656 = vpop.permute.xlu0 %655
  %657 = vrot.lane.b32.xlu0 %v436, 111
  %v658 = vpop.permute.xlu0 %657
  %v659 = vsel %vm282, %v656, %v658
  %v660 = vsel %vm282, %v654, %v656
  %v661 = vsel %vm282, %v652, %v654
  %v662 = vsel %vm282, %v658, %v652
  %v663 = vld [vmem:[%s287] ss:$8 sm:$0xf]
  %v665 = vperm.slane %v663, 0
  %v666 = vperm.slane %v663, 1
  %v667 = vperm.slane %v663, 2
  %v668 = vperm.slane %v663, 3
  %v673 = vmul.f32 %v661, %v665
  %v674 = vmul.f32 %v660, %v666
  %v675 = vmul.f32 %v659, %v667
  %v676 = vmul.f32 %v662, %v668
  %677 = vst [vmem:[#allocation4 + $0x100] sm:$0xff] %v673
  %678 = vst [vmem:[#allocation4 + $0x108] sm:$0xff] %v674
  %679 = vst [vmem:[#allocation4 + $0x110] sm:$0xff] %v675
  %680 = vst [vmem:[#allocation4 + $0x118] sm:$0xff] %v676
  %v681 = vld [vmem:[%s3] sm:$0xf]
  %v682 = vld [vmem:[#allocation4] sm:$0xff]
  %v683 = vld [vmem:[#allocation4 + $0x8] sm:$0xff]
  %v684 = vld [vmem:[#allocation4 + $0x10] sm:$0xff]
  %v685 = vld [vmem:[#allocation4 + $0x18] sm:$0xff]
  %v686 = vld [vmem:[#allocation4 + $0x20] sm:$0xff]
  %v687 = vld [vmem:[#allocation4 + $0x28] sm:$0xff]
  %v688 = vld [vmem:[#allocation4 + $0x30] sm:$0xff]
  %v689 = vld [vmem:[#allocation4 + $0x38] sm:$0xff]
  %v690 = vld [vmem:[#allocation4 + $0x40] sm:$0xff]
  %v691 = vld [vmem:[#allocation4 + $0x48] sm:$0xff]
  %v692 = vld [vmem:[#allocation4 + $0x50] sm:$0xff]
  %v693 = vld [vmem:[#allocation4 + $0x58] sm:$0xff]
  %v694 = vld [vmem:[#allocation4 + $0x60] sm:$0xff]
  %v695 = vld [vmem:[#allocation4 + $0x68] sm:$0xff]
  %v696 = vld [vmem:[#allocation4 + $0x70] sm:$0xff]
  %v697 = vld [vmem:[#allocation4 + $0x78] sm:$0xff]
  %v698 = vld [vmem:[#allocation4 + $0x80] sm:$0xff]
  %v699 = vld [vmem:[#allocation4 + $0x88] sm:$0xff]
  %v700 = vld [vmem:[#allocation4 + $0x90] sm:$0xff]
  %v701 = vld [vmem:[#allocation4 + $0x98] sm:$0xff]
  %v702 = vld [vmem:[#allocation4 + $0xa0] sm:$0xff]
  %v703 = vld [vmem:[#allocation4 + $0xa8] sm:$0xff]
  %v704 = vld [vmem:[#allocation4 + $0xb0] sm:$0xff]
  %v705 = vld [vmem:[#allocation4 + $0xb8] sm:$0xff]
  %v706 = vld [vmem:[#allocation4 + $0xc0] sm:$0xff]
  %v707 = vld [vmem:[#allocation4 + $0xc8] sm:$0xff]
  %v708 = vld [vmem:[#allocation4 + $0xd0] sm:$0xff]
  %v709 = vld [vmem:[#allocation4 + $0xd8] sm:$0xff]
  %v710 = vld [vmem:[#allocation4 + $0xe0] sm:$0xff]
  %v711 = vld [vmem:[#allocation4 + $0xe8] sm:$0xff]
  %v712 = vld [vmem:[#allocation4 + $0xf0] sm:$0xff]
  %v713 = vld [vmem:[#allocation4 + $0xf8] sm:$0xff]
  %v714 = vld [vmem:[#allocation4 + $0x100] sm:$0xff]
  %v715 = vld [vmem:[#allocation4 + $0x108] sm:$0xff]
  %v716 = vld [vmem:[#allocation4 + $0x110] sm:$0xff]
  %v717 = vld [vmem:[#allocation4 + $0x118] sm:$0xff]
  %v718 = vld [vmem:[%s4] sm:$0xf]
  %720 = vset.pattern.permute.xlu0 0
  %721 = vperm.xlu0 %720, %v718
  %v722 = vpop.permute.xlu0 %721
  %v725 = vsel %vm349, %v681, 0
  %727 = vmatpush.msra.mxu0 0.0
  %728 = vmatpush.msra.mxu0 0.0
  %729 = vmatpush.msra.mxu0 0.0
  %730 = vmatpush.msra.mxu0 0.0
  %731 = vmatpush.msra.mxu0 0.0
  %732 = vmatpush.msra.mxu0 0.0
  %733 = vmatpush.msra.mxu0 0.0
  %734 = vmatpush.msra.mxu0 %v714
  %735 = vmatpush.msra.mxu0 %v710
  %736 = vmatpush.msra.mxu0 %v706
  %737 = vmatpush.msra.mxu0 %v702
  %738 = vmatpush.msra.mxu0 %v698
  %739 = vmatpush.msra.mxu0 %v694
  %740 = vmatpush.msra.mxu0 %v690
  %741 = vmatpush.msra.mxu0 %v686
  %742 = vmatpush.msra.mxu0 %v682
  %743 = vmatmul.f32.gmra.mxu0 %v725
  %v744 = vpop.f32.mrf.mxu0
  %v745 = vadd.f32 %v722, %v744
  %746 = vdwg.mxu0
  %747 = vmatpush.msra.mxu0 0.0
  %748 = vmatpush.msra.mxu0 0.0
  %749 = vmatpush.msra.mxu0 0.0
  %750 = vmatpush.msra.mxu0 0.0
  %751 = vmatpush.msra.mxu0 0.0
  %752 = vmatpush.msra.mxu0 0.0
  %753 = vmatpush.msra.mxu0 0.0
  %754 = vmatpush.msra.mxu0 %v715
  %755 = vmatpush.msra.mxu0 %v711
  %756 = vmatpush.msra.mxu0 %v707
  %757 = vmatpush.msra.mxu0 %v703
  %758 = vmatpush.msra.mxu0 %v699
  %759 = vmatpush.msra.mxu0 %v695
  %760 = vmatpush.msra.mxu0 %v691
  %761 = vmatpush.msra.mxu0 %v687
  %762 = vmatpush.msra.mxu0 %v683
  %763 = vmatmul.f32.gmra.mxu0 %v725
  %v764 = vpop.f32.mrf.mxu0
  %v765 = vadd.f32 %v722, %v764
  %766 = vdwg.mxu0
  %767 = vmatpush.msra.mxu0 0.0
  %768 = vmatpush.msra.mxu0 0.0
  %769 = vmatpush.msra.mxu0 0.0
  %770 = vmatpush.msra.mxu0 0.0
  %771 = vmatpush.msra.mxu0 0.0
  %772 = vmatpush.msra.mxu0 0.0
  %773 = vmatpush.msra.mxu0 0.0
  %774 = vmatpush.msra.mxu0 %v716
  %775 = vmatpush.msra.mxu0 %v712
  %776 = vmatpush.msra.mxu0 %v708
  %777 = vmatpush.msra.mxu0 %v704
  %778 = vmatpush.msra.mxu0 %v700
  %779 = vmatpush.msra.mxu0 %v696
  %780 = vmatpush.msra.mxu0 %v692
  %781 = vmatpush.msra.mxu0 %v688
  %782 = vmatpush.msra.mxu0 %v684
  %783 = vmatmul.f32.gmra.mxu0 %v725
  %v784 = vpop.f32.mrf.mxu0
  %v785 = vadd.f32 %v722, %v784
  %786 = vdwg.mxu0
  %787 = vmatpush.msra.mxu0 0.0
  %788 = vmatpush.msra.mxu0 0.0
  %789 = vmatpush.msra.mxu0 0.0
  %790 = vmatpush.msra.mxu0 0.0
  %791 = vmatpush.msra.mxu0 0.0
  %792 = vmatpush.msra.mxu0 0.0
  %793 = vmatpush.msra.mxu0 0.0
  %794 = vmatpush.msra.mxu0 %v717
  %795 = vmatpush.msra.mxu0 %v713
  %796 = vmatpush.msra.mxu0 %v709
  %797 = vmatpush.msra.mxu0 %v705
  %798 = vmatpush.msra.mxu0 %v701
  %799 = vmatpush.msra.mxu0 %v697
  %800 = vmatpush.msra.mxu0 %v693
  %801 = vmatpush.msra.mxu0 %v689
  %802 = vmatpush.msra.mxu0 %v685
  %803 = vmatmul.f32.gmra.mxu0 %v725
  %v804 = vpop.f32.mrf.mxu0
  %v805 = vadd.f32 %v722, %v804
  %806 = vdwg.mxu0
  %807 = vst [vmem:[%s6] sm:$0xf] %v745
  %808 = vst [vmem:[%s6 + $0x8] sm:$0xf] %v765
  %v811 = vrot.slane %v785, 4
  %v812 = vrot.slane %v805, 4
  %815 = vst [vmem:[%s6] sm:$0xf0] %v811
  %816 = vst [vmem:[%s6 + $0x8] sm:$0xf0] %v812
  // Predicated region
  $region26: #{stacked_autoencoder_forward.1} parent=0 // pred_check
    _
  $region27: #{stacked_autoencoder_forward.1} parent=0 // pred_check_branch
    %818 = sbr.rel (0) target = $region29
  $region28: #{stacked_autoencoder_forward.1} parent=0 // pred_region
    _
  $region29: #{stacked_autoencoder_forward.1} parent=0 // pred_fallthru
    _
  // Predicated region
  $region30: #{stacked_autoencoder_forward.1} parent=0 // pred_check
    _
  $region31: #{stacked_autoencoder_forward.1} parent=0 // pred_check_branch
    %820 = sbr.rel (0) target = $region33
  $region32: #{stacked_autoencoder_forward.1} parent=0 // pred_region
    _
  $region33: #{stacked_autoencoder_forward.1} parent=0 // pred_fallthru
    _

</llo_original>
